<compile_context>
chip_gen: v5e
topology: v5e:2x2
jax: 0.10.0
libtpu: 0.0.40
codegen_flags: <defaults>
</compile_context>

<pallas_src>
import functools

import jax
import jax.numpy as jnp
from jax.experimental import pallas as pl
from jax.experimental.pallas import tpu as pltpu

IN_FEATURES = 8
HIDDEN = 6
SUB = 8  # sublanes per vreg -> batch sub-group factor


def _sigmoid(z):
    # exp and the approximate reciprocal both run in the EUP slot, keeping the
    # nonlinearity off the VALU critical path.
    return pl.reciprocal(1.0 + jnp.exp(-z), approx=True)


def mlp_kernel(x_ref, w1_ref, b1_ref, w2_ref, b2_ref, o_ref):
    """One batch tile; batch packed on sublanes AND lanes.

    x_ref : (64, L) VMEM   row k*8+s = feature k of batch sub-group s.
    w1_ref: (48, 64) VMEM  block-diagonal expansion of w1 (see wrapper).
    b1_ref: (6,)  SMEM f32
    w2_ref: (6,)  SMEM f32
    b2_ref: (1,)  SMEM f32
    o_ref : (8, L) VMEM    row s = outputs of batch sub-group s.
    """
    x = x_ref[...].astype(jnp.float32)          # one dense (64, L) load (+ upcast if bf16)

    # Layer 1 on the (otherwise idle) MXU:
    #   h[j*8+s, :] = sum_k w1[k, j] * x[k*8+s, :]
    h = jnp.dot(w1_ref[...], x, preferred_element_type=jnp.float32)   # (48, L)

    # Layer 2: 6-term VPU FMA chain on full (8, L) vregs; sigmoids on the EUP.
    y_acc = None
    for j in range(HIDDEN):
        h_j = _sigmoid(h[j * SUB:(j + 1) * SUB, :] + b1_ref[j])       # (8, L), aligned slab
        t = h_j * w2_ref[j]
        y_acc = t if y_acc is None else y_acc + t

    y = _sigmoid(y_acc + b2_ref[0])
    o_ref[...] = y.astype(o_ref.dtype)


@functools.partial(jax.jit, static_argnames=("block_l", "stream_dtype"))
def mlp_forward(x, w1, b1, w2, b2, *, block_l=8192, stream_dtype=jnp.float32):
    """x: [N, 8]. w1: [8, 6], b1: [1, 6], w2: [6, 1], b2: [1, 1]. Returns [N, 1].

    block_l = lane width of one tile (batch elements per grid step = 8*block_l).
    stream_dtype: set to jnp.bfloat16 on v6e/v7x to halve HBM read traffic.
    """
    n = x.shape[0]
    n_sub = pl.cdiv(n, SUB)                               # lane columns needed
    # Clamp so tiny batches don't pad to a full multi-MiB tile; keep lane alignment.
    block_l = max(128, min(block_l, pl.cdiv(n_sub, 128) * 128))
    c_pad = pl.cdiv(n_sub, block_l) * block_l
    n_pad = c_pad * SUB
    grid = (c_pad // block_l,)

    # Fused pad + layout transform (single XLA copy, inside this jit):
    #   x_big[k*8 + s, c] = x[c*8 + s, k]
    x_pad = jnp.pad(x, ((0, n_pad - n), (0, 0)))
    x_big = x_pad.reshape(c_pad, SUB, IN_FEATURES).transpose(2, 1, 0)
    x_big = x_big.reshape(IN_FEATURES * SUB, c_pad).astype(stream_dtype)

    # Block-diagonal expansion of w1 so layer 1 runs on the MXU against the
    # (64, L) tile:  w1_big[j*8+s, k*8+t] = w1[k, j] * (s == t).   (48x64, 12 KiB)
    eye = jnp.eye(SUB, dtype=jnp.float32)
    w1_big = jnp.einsum("kj,st->jskt", w1.astype(jnp.float32), eye)
    w1_big = w1_big.reshape(HIDDEN * SUB, IN_FEATURES * SUB)

    b1_flat = b1.reshape(-1).astype(jnp.float32)
    w2_flat = w2.reshape(-1).astype(jnp.float32)
    b2_flat = b2.reshape(-1).astype(jnp.float32)

    y_big = pl.pallas_call(
        mlp_kernel,
        out_shape=jax.ShapeDtypeStruct((SUB, c_pad), jnp.float32),
        grid=grid,
        in_specs=[
            pl.BlockSpec((IN_FEATURES * SUB, block_l), lambda i: (0, i)),  # x tile, pipelined
            pl.BlockSpec(memory_space=pltpu.MemorySpace.VMEM),             # w1_big (resident)
            pl.BlockSpec(memory_space=pltpu.MemorySpace.SMEM),             # b1
            pl.BlockSpec(memory_space=pltpu.MemorySpace.SMEM),             # w2
            pl.BlockSpec(memory_space=pltpu.MemorySpace.SMEM),             # b2
        ],
        out_specs=pl.BlockSpec((SUB, block_l), lambda i: (0, i)),
        compiler_params=pltpu.CompilerParams(
            dimension_semantics=("parallel",)),
    )(x_big, w1_big, b1_flat, w2_flat, b2_flat)

    # Undo the (sublane, lane) batch packing: y_big[s, c] = y[c*8 + s].
    return y_big.T.reshape(-1)[:n].reshape(n, 1).astype(x.dtype)


def init_params(key):
    """Deterministic init mirroring torch.nn.Linear's U(-1/sqrt(fan_in), 1/sqrt(fan_in))."""
    k1, k2, k3, k4 = jax.random.split(key, 4)
    bound1 = 1.0 / jnp.sqrt(8.0)
    bound2 = 1.0 / jnp.sqrt(6.0)
    w1 = jax.random.uniform(k1, (8, 6), jnp.float32, -bound1, bound1)   # [in, out]
    b1 = jax.random.uniform(k2, (1, 6), jnp.float32, -bound1, bound1)
    w2 = jax.random.uniform(k3, (6, 1), jnp.float32, -bound2, bound2)
    b2 = jax.random.uniform(k4, (1, 1), jnp.float32, -bound2, bound2)
    return w1, b1, w2, b2


if __name__ == "__main__":
    key = jax.random.PRNGKey(0)
    k_x1, k_x2, k_p = jax.random.split(key, 3)
    w1, b1, w2, b2 = init_params(k_p)

    def reference(xx):
        return jax.nn.sigmoid(jax.nn.sigmoid(xx @ w1 + b1) @ w2 + b2)

    # Test 1: small ragged batch with a forced-small tile -> multi-step pipelined grid.
    n1 = 3000
    x1 = jax.random.normal(k_x1, (n1, IN_FEATURES), dtype=jnp.float32)
    y1 = mlp_forward(x1, w1, b1, w2, b2, block_l=128)
    jax.block_until_ready(y1)
    assert y1.shape == (n1, 1)
    # Tolerance accounts for the EUP approximate reciprocal in the sigmoid.
    assert jnp.allclose(y1, reference(x1), atol=5e-3, rtol=0.0), "mismatch (small batch)"

    # Test 2: larger batch, bigger tile, multi-step grid with a ragged tail.
    n2 = 100_000
    x2 = jax.random.normal(k_x2, (n2, IN_FEATURES), dtype=jnp.float32)
    y2 = mlp_forward(x2, w1, b1, w2, b2, block_l=2048)
    jax.block_until_ready(y2)
    assert y2.shape == (n2, 1)
    assert jnp.allclose(y2, reference(x2), atol=5e-3, rtol=0.0), "mismatch (large batch)"

    print("KERNEL_OK")
</pallas_src>

<mosaic_0001>
module attributes {stable_mosaic.version = 11 : i64} {
  func.func @mlp_kernel(%arg0: i32, %arg1: memref<64x128xf32, #tpu.memory_space<vmem>>, %arg2: memref<48x64xf32, #tpu.memory_space<vmem>>, %arg3: memref<6xf32, #tpu.memory_space<smem>>, %arg4: memref<6xf32, #tpu.memory_space<smem>>, %arg5: memref<1xf32, #tpu.memory_space<smem>>, %arg6: memref<8x128xf32, #tpu.memory_space<vmem>>) attributes {dimension_semantics = [#tpu.dimension_semantics<parallel>], iteration_bounds = array<i64: 3>, scalar_prefetch = 0 : i64, scratch_operands = 0 : i64, tpu.core_type = #tpu.core_type<tc>, window_params = [{transform_indices = @transform_0, window_bounds = array<i64: 64, 128>}, {pipeline_mode = #tpu.pipeline_mode<synchronous>, transform_indices = @transform_1, window_bounds = array<i64: 48, 64>}, {transform_indices = @transform_2, window_bounds = array<i64: 6>}, {transform_indices = @transform_3, window_bounds = array<i64: 6>}, {transform_indices = @transform_4, window_bounds = array<i64: 1>}, {transform_indices = @transform_5, window_bounds = array<i64: 8, 128>}]} {
    %c0 = arith.constant 0 : index
    %c0_0 = arith.constant 0 : index
    %0 = vector.load %arg1[%c0, %c0_0] : memref<64x128xf32, #tpu.memory_space<vmem>>, vector<64x128xf32>
    %c0_1 = arith.constant 0 : index
    %c0_2 = arith.constant 0 : index
    %1 = vector.load %arg2[%c0_1, %c0_2] : memref<48x64xf32, #tpu.memory_space<vmem>>, vector<48x64xf32>
    %cst = arith.constant dense<0.000000e+00> : vector<48x128xf32>
    %2 = tpu.matmul %1, %0, %cst {dimension_numbers = #tpu.dot_dimension_numbers<[1], [0], [0], [1], [0, 0, 1, 1], [], []>} : vector<48x64xf32>, vector<64x128xf32>, vector<48x128xf32> -> vector<48x128xf32>
    %3 = vector.extract_strided_slice %2 {offsets = [0, 0], sizes = [8, 128], strides = [1, 1]} : vector<48x128xf32> to vector<8x128xf32>
    %c0_3 = arith.constant 0 : index
    %4 = memref.load %arg3[%c0_3] : memref<6xf32, #tpu.memory_space<smem>>
    %5 = vector.broadcast %4 : f32 to vector<8x128xf32>
    %6 = arith.addf %3, %5 : vector<8x128xf32>
    %cst_4 = arith.constant 0.000000e+00 : f32
    %7 = vector.broadcast %cst_4 : f32 to vector<8x128xf32>
    %8 = arith.subf %7, %6 : vector<8x128xf32>
    %9 = math.exp %8 : vector<8x128xf32>
    %cst_5 = arith.constant 1.000000e+00 : f32
    %10 = vector.broadcast %cst_5 : f32 to vector<8x128xf32>
    %11 = arith.addf %10, %9 : vector<8x128xf32>
    %12 = tpu.reciprocal %11 {approx = true} : vector<8x128xf32> -> vector<8x128xf32>
    %c0_6 = arith.constant 0 : index
    %13 = memref.load %arg4[%c0_6] : memref<6xf32, #tpu.memory_space<smem>>
    %14 = vector.broadcast %13 : f32 to vector<8x128xf32>
    %15 = arith.mulf %12, %14 : vector<8x128xf32>
    %16 = vector.extract_strided_slice %2 {offsets = [8, 0], sizes = [8, 128], strides = [1, 1]} : vector<48x128xf32> to vector<8x128xf32>
    %c1 = arith.constant 1 : index
    %17 = memref.load %arg3[%c1] : memref<6xf32, #tpu.memory_space<smem>>
    %18 = vector.broadcast %17 : f32 to vector<8x128xf32>
    %19 = arith.addf %16, %18 : vector<8x128xf32>
    %cst_7 = arith.constant 0.000000e+00 : f32
    %20 = vector.broadcast %cst_7 : f32 to vector<8x128xf32>
    %21 = arith.subf %20, %19 : vector<8x128xf32>
    %22 = math.exp %21 : vector<8x128xf32>
    %cst_8 = arith.constant 1.000000e+00 : f32
    %23 = vector.broadcast %cst_8 : f32 to vector<8x128xf32>
    %24 = arith.addf %23, %22 : vector<8x128xf32>
    %25 = tpu.reciprocal %24 {approx = true} : vector<8x128xf32> -> vector<8x128xf32>
    %c1_9 = arith.constant 1 : index
    %26 = memref.load %arg4[%c1_9] : memref<6xf32, #tpu.memory_space<smem>>
    %27 = vector.broadcast %26 : f32 to vector<8x128xf32>
    %28 = arith.mulf %25, %27 : vector<8x128xf32>
    %29 = arith.addf %15, %28 : vector<8x128xf32>
    %30 = vector.extract_strided_slice %2 {offsets = [16, 0], sizes = [8, 128], strides = [1, 1]} : vector<48x128xf32> to vector<8x128xf32>
    %c2 = arith.constant 2 : index
    %31 = memref.load %arg3[%c2] : memref<6xf32, #tpu.memory_space<smem>>
    %32 = vector.broadcast %31 : f32 to vector<8x128xf32>
    %33 = arith.addf %30, %32 : vector<8x128xf32>
    %cst_10 = arith.constant 0.000000e+00 : f32
    %34 = vector.broadcast %cst_10 : f32 to vector<8x128xf32>
    %35 = arith.subf %34, %33 : vector<8x128xf32>
    %36 = math.exp %35 : vector<8x128xf32>
    %cst_11 = arith.constant 1.000000e+00 : f32
    %37 = vector.broadcast %cst_11 : f32 to vector<8x128xf32>
    %38 = arith.addf %37, %36 : vector<8x128xf32>
    %39 = tpu.reciprocal %38 {approx = true} : vector<8x128xf32> -> vector<8x128xf32>
    %c2_12 = arith.constant 2 : index
    %40 = memref.load %arg4[%c2_12] : memref<6xf32, #tpu.memory_space<smem>>
    %41 = vector.broadcast %40 : f32 to vector<8x128xf32>
    %42 = arith.mulf %39, %41 : vector<8x128xf32>
    %43 = arith.addf %29, %42 : vector<8x128xf32>
    %44 = vector.extract_strided_slice %2 {offsets = [24, 0], sizes = [8, 128], strides = [1, 1]} : vector<48x128xf32> to vector<8x128xf32>
    %c3 = arith.constant 3 : index
    %45 = memref.load %arg3[%c3] : memref<6xf32, #tpu.memory_space<smem>>
    %46 = vector.broadcast %45 : f32 to vector<8x128xf32>
    %47 = arith.addf %44, %46 : vector<8x128xf32>
    %cst_13 = arith.constant 0.000000e+00 : f32
    %48 = vector.broadcast %cst_13 : f32 to vector<8x128xf32>
    %49 = arith.subf %48, %47 : vector<8x128xf32>
    %50 = math.exp %49 : vector<8x128xf32>
    %cst_14 = arith.constant 1.000000e+00 : f32
    %51 = vector.broadcast %cst_14 : f32 to vector<8x128xf32>
    %52 = arith.addf %51, %50 : vector<8x128xf32>
    %53 = tpu.reciprocal %52 {approx = true} : vector<8x128xf32> -> vector<8x128xf32>
    %c3_15 = arith.constant 3 : index
    %54 = memref.load %arg4[%c3_15] : memref<6xf32, #tpu.memory_space<smem>>
    %55 = vector.broadcast %54 : f32 to vector<8x128xf32>
    %56 = arith.mulf %53, %55 : vector<8x128xf32>
    %57 = arith.addf %43, %56 : vector<8x128xf32>
    %58 = vector.extract_strided_slice %2 {offsets = [32, 0], sizes = [8, 128], strides = [1, 1]} : vector<48x128xf32> to vector<8x128xf32>
    %c4 = arith.constant 4 : index
    %59 = memref.load %arg3[%c4] : memref<6xf32, #tpu.memory_space<smem>>
    %60 = vector.broadcast %59 : f32 to vector<8x128xf32>
    %61 = arith.addf %58, %60 : vector<8x128xf32>
    %cst_16 = arith.constant 0.000000e+00 : f32
    %62 = vector.broadcast %cst_16 : f32 to vector<8x128xf32>
    %63 = arith.subf %62, %61 : vector<8x128xf32>
    %64 = math.exp %63 : vector<8x128xf32>
    %cst_17 = arith.constant 1.000000e+00 : f32
    %65 = vector.broadcast %cst_17 : f32 to vector<8x128xf32>
    %66 = arith.addf %65, %64 : vector<8x128xf32>
    %67 = tpu.reciprocal %66 {approx = true} : vector<8x128xf32> -> vector<8x128xf32>
    %c4_18 = arith.constant 4 : index
    %68 = memref.load %arg4[%c4_18] : memref<6xf32, #tpu.memory_space<smem>>
    %69 = vector.broadcast %68 : f32 to vector<8x128xf32>
    %70 = arith.mulf %67, %69 : vector<8x128xf32>
    %71 = arith.addf %57, %70 : vector<8x128xf32>
    %72 = vector.extract_strided_slice %2 {offsets = [40, 0], sizes = [8, 128], strides = [1, 1]} : vector<48x128xf32> to vector<8x128xf32>
    %c5 = arith.constant 5 : index
    %73 = memref.load %arg3[%c5] : memref<6xf32, #tpu.memory_space<smem>>
    %74 = vector.broadcast %73 : f32 to vector<8x128xf32>
    %75 = arith.addf %72, %74 : vector<8x128xf32>
    %cst_19 = arith.constant 0.000000e+00 : f32
    %76 = vector.broadcast %cst_19 : f32 to vector<8x128xf32>
    %77 = arith.subf %76, %75 : vector<8x128xf32>
    %78 = math.exp %77 : vector<8x128xf32>
    %cst_20 = arith.constant 1.000000e+00 : f32
    %79 = vector.broadcast %cst_20 : f32 to vector<8x128xf32>
    %80 = arith.addf %79, %78 : vector<8x128xf32>
    %81 = tpu.reciprocal %80 {approx = true} : vector<8x128xf32> -> vector<8x128xf32>
    %c5_21 = arith.constant 5 : index
    %82 = memref.load %arg4[%c5_21] : memref<6xf32, #tpu.memory_space<smem>>
    %83 = vector.broadcast %82 : f32 to vector<8x128xf32>
    %84 = arith.mulf %81, %83 : vector<8x128xf32>
    %85 = arith.addf %71, %84 : vector<8x128xf32>
    %c0_22 = arith.constant 0 : index
    %86 = memref.load %arg5[%c0_22] : memref<1xf32, #tpu.memory_space<smem>>
    %87 = vector.broadcast %86 : f32 to vector<8x128xf32>
    %88 = arith.addf %85, %87 : vector<8x128xf32>
    %cst_23 = arith.constant 0.000000e+00 : f32
    %89 = vector.broadcast %cst_23 : f32 to vector<8x128xf32>
    %90 = arith.subf %89, %88 : vector<8x128xf32>
    %91 = math.exp %90 : vector<8x128xf32>
    %cst_24 = arith.constant 1.000000e+00 : f32
    %92 = vector.broadcast %cst_24 : f32 to vector<8x128xf32>
    %93 = arith.addf %92, %91 : vector<8x128xf32>
    %94 = tpu.reciprocal %93 {approx = true} : vector<8x128xf32> -> vector<8x128xf32>
    %c0_25 = arith.constant 0 : index
    %c0_26 = arith.constant 0 : index
    %95 = vector.load %arg6[%c0_25, %c0_26] : memref<8x128xf32, #tpu.memory_space<vmem>>, vector<8x128xf32>
    tpu.vector_store %arg6[%c0_25, %c0_26], %94 {strides = array<i32>} : memref<8x128xf32, #tpu.memory_space<vmem>>, vector<8x128xf32>,
    return
  }
  func.func @transform_0(%arg0: i32) -> (i32, i32) {
    %c0_i32 = arith.constant 0 : i32
    %c0_i32_0 = arith.constant 0 : i32
    return %c0_i32, %arg0 : i32, i32
  }
  func.func @transform_1(%arg0: i32) -> (i32, i32) {
    %c0_i32 = arith.constant 0 : i32
    %c0_i32_0 = arith.constant 0 : i32
    %c0_i32_1 = arith.constant 0 : i32
    return %c0_i32, %c0_i32_0 : i32, i32
  }
  func.func @transform_2(%arg0: i32) -> i32 {
    %c0_i32 = arith.constant 0 : i32
    %c0_i32_0 = arith.constant 0 : i32
    return %c0_i32 : i32
  }
  func.func @transform_3(%arg0: i32) -> i32 {
    %c0_i32 = arith.constant 0 : i32
    %c0_i32_0 = arith.constant 0 : i32
    return %c0_i32 : i32
  }
  func.func @transform_4(%arg0: i32) -> i32 {
    %c0_i32 = arith.constant 0 : i32
    %c0_i32_0 = arith.constant 0 : i32
    return %c0_i32 : i32
  }
  func.func @transform_5(%arg0: i32) -> (i32, i32) {
    %c0_i32 = arith.constant 0 : i32
    %c0_i32_0 = arith.constant 0 : i32
    return %c0_i32, %arg0 : i32, i32
  }
}

</mosaic_0001>

<llo_original>
// kernel: mlp_forward.1
$region0: #{mlp_forward.1}
  #allocation0 [shape = 'u32[]', space=smem, size = 0x4, offset = 0x4, fixed_abs, tag = 'smem constant byte address 0x4 - core index']
  #allocation1 [shape = 'u32[72,128]{1,0:T(1,128)}', space=vmem, size = 0x9000, scoped, tag = 'internal scratch']
  #allocation2 [shape = 'f32[1]{0:T(128)S(6)}', space=smem, size = 0x200, scoped, tag = 'scoped memory for mlp_forward.1']
  %s0 = inlined_call_operand.vmem [shape: f32[64,384], index: 0, kind: input, shape index: {}]
  %s1 = inlined_call_operand.vmem [shape: f32[48,64], index: 1, kind: input, shape index: {}]
  %s2 = inlined_call_operand.vmem [shape: f32[6], index: 2, kind: input, shape index: {}]
  %s3 = inlined_call_operand.vmem [shape: f32[6], index: 3, kind: input, shape index: {}]
  %s4 = inlined_call_operand.<no memory space> [shape: f32[1], index: 4, kind: input, shape index: {}]
  %s5 = inlined_call_operand.vmem [shape: f32[8,384], index: 5, kind: output, shape index: {}]
  %s6 = sld [smem:[#allocation0]]
  $region99: #{mlp_forward.1} parent=0
    _
  %s8 = ssub.s32 1, %s6
  %s9 = scalar_select 0, %s8, %s6
  %10 = sst [smem:[#allocation2]] %s4
  $region1: #{mlp_forward.1} parent=0
    #allocation3 [shape = 'u8[65536]{0}', space=vmem, size = 0x10000, scoped, tag = 'input window, operand 0']
    #allocation4 [shape = 'u8[512]{0}', space=smem, size = 0x200, scoped, tag = 'input window, operand 2, single buffered']
    #allocation5 [shape = 's32[2]{0}', space=sflag, size = 0x8, scoped, tag = 'scoped memory for mlp_forward.1']
    #allocation6 [shape = 'u8[512]{0}', space=smem, size = 0x200, scoped, tag = 'input window, operand 3, single buffered']
    #allocation7 [shape = 's32[1]{0}', space=sflag, size = 0x4, scoped, tag = 'scoped memory for mlp_forward.1']
    %11 = vsyncpa [#allocation5], 0
    %12 = vsyncpa [#allocation7], 0
    loop: start=0, step=1, limit=5
    $region2: #{mlp_forward.1} parent=1 // loop_pre_header
      _
    $region3: #{mlp_forward.1} parent=1 // loop_header
      %s14 = sphi 0, %s18
      %p15 = scmp.ge.s32.totalorder %s14, 5
      %s24 = sphi 0, %s26
      %s27 = sphi 0, %s24
      %s28 = sphi 0, %s27
      %s44 = sphi 0, %s28
      %s48 = sphi 0, %s48
      %s50 = sphi 0, %s48
      %s51 = sphi 0, %s50
      %s65 = sphi 0, %s51
      %s69 = sphi 0, %s69
      %s71 = sphi 0, %s69
      %s72 = sphi 0, %s71
      %s86 = sphi 0, %s72
      %s90 = sphi 0, %s90
      %s92 = sphi 0, %s90
      %s93 = sphi 0, %s92
      %s107 = sphi 0, %s93
      %s111 = sphi 0, %s111
      %s113 = sphi 0, %s111
      %s114 = sphi 0, %s113
      %s128 = sphi 0, %s114
      %s134 = sphi 0, %s136
      %s137 = sphi 0, %s134
      %s138 = sphi 0, %s137
      %s154 = sphi 0, %s138
    $region4: #{mlp_forward.1} parent=1 // loop_header_branch
      %17 = sbr.rel (%p15) target = $region8
    $region5: #{mlp_forward.1} parent=1 // loop_body
      %s19 = ssub.s32 %s14, 1
      %s20 = ssub.s32 %s14, 2
      %s21 = sadd.s32 %s14, 1
      %s22 = ssub.s32 %s14, %s21
      %p23 = scmp.eq.s32.totalorder %s22, 0
      %s25 = sadd.s32 %s24, 1
      %s26 = scalar_select %p23, %s24, %s25
      %p29 = pneg %p23
      %p30 = scmp.eq.s32.totalorder %s14, 2
      %p31 = por %p29, %p30
      %p32 = scmp.ne.s32.totalorder %s24, %s27
      %p33 = scmp.eq.s32.totalorder %s14, 0
      %p34 = por %p32, %p33
      %p35 = scmp.ne.s32.totalorder %s24, %s27
      %p36 = scmp.eq.s32.totalorder %s19, 2
      %p37 = por %p35, %p36
      %p38 = scmp.ne.s32.totalorder %s27, %s28
      %p39 = scmp.eq.s32.totalorder %s19, 0
      %p40 = por %p38, %p39
      %p41 = scmp.ne.s32.totalorder %s27, %s28
      %p42 = scmp.eq.s32.totalorder %s20, 2
      %p43 = por %p41, %p42
      %p45 = scmp.ne.s32.totalorder %s28, %s44
      %p46 = scmp.eq.s32.totalorder %s20, 0
      %p47 = por %p45, %p46
      %s49 = sadd.s32 %s48, 1
      %p52 = scmp.eq.s32.totalorder %s14, 2
      %p53 = scmp.ne.s32.totalorder %s48, %s50
      %p54 = scmp.eq.s32.totalorder %s14, 0
      %p55 = por %p53, %p54
      %p56 = scmp.ne.s32.totalorder %s48, %s50
      %p57 = scmp.eq.s32.totalorder %s19, 2
      %p58 = por %p56, %p57
      %p59 = scmp.ne.s32.totalorder %s50, %s51
      %p60 = scmp.eq.s32.totalorder %s19, 0
      %p61 = por %p59, %p60
      %p62 = scmp.ne.s32.totalorder %s50, %s51
      %p63 = scmp.eq.s32.totalorder %s20, 2
      %p64 = por %p62, %p63
      %p66 = scmp.ne.s32.totalorder %s51, %s65
      %p67 = scmp.eq.s32.totalorder %s20, 0
      %p68 = por %p66, %p67
      %s70 = sadd.s32 %s69, 1
      %p73 = scmp.eq.s32.totalorder %s14, 2
      %p74 = scmp.ne.s32.totalorder %s69, %s71
      %p75 = scmp.eq.s32.totalorder %s14, 0
      %p76 = por %p74, %p75
      %p77 = scmp.ne.s32.totalorder %s69, %s71
      %p78 = scmp.eq.s32.totalorder %s19, 2
      %p79 = por %p77, %p78
      %p80 = scmp.ne.s32.totalorder %s71, %s72
      %p81 = scmp.eq.s32.totalorder %s19, 0
      %p82 = por %p80, %p81
      %p83 = scmp.ne.s32.totalorder %s71, %s72
      %p84 = scmp.eq.s32.totalorder %s20, 2
      %p85 = por %p83, %p84
      %p87 = scmp.ne.s32.totalorder %s72, %s86
      %p88 = scmp.eq.s32.totalorder %s20, 0
      %p89 = por %p87, %p88
      %s91 = sadd.s32 %s90, 1
      %p94 = scmp.eq.s32.totalorder %s14, 2
      %p95 = scmp.ne.s32.totalorder %s90, %s92
      %p96 = scmp.eq.s32.totalorder %s14, 0
      %p97 = por %p95, %p96
      %p98 = scmp.ne.s32.totalorder %s90, %s92
      %p99 = scmp.eq.s32.totalorder %s19, 2
      %p100 = por %p98, %p99
      %p101 = scmp.ne.s32.totalorder %s92, %s93
      %p102 = scmp.eq.s32.totalorder %s19, 0
      %p103 = por %p101, %p102
      %p104 = scmp.ne.s32.totalorder %s92, %s93
      %p105 = scmp.eq.s32.totalorder %s20, 2
      %p106 = por %p104, %p105
      %p108 = scmp.ne.s32.totalorder %s93, %s107
      %p109 = scmp.eq.s32.totalorder %s20, 0
      %p110 = por %p108, %p109
      %s112 = sadd.s32 %s111, 1
      %p115 = scmp.eq.s32.totalorder %s14, 2
      %p116 = scmp.ne.s32.totalorder %s111, %s113
      %p117 = scmp.eq.s32.totalorder %s14, 0
      %p118 = por %p116, %p117
      %p119 = scmp.ne.s32.totalorder %s111, %s113
      %p120 = scmp.eq.s32.totalorder %s19, 2
      %p121 = por %p119, %p120
      %p122 = scmp.ne.s32.totalorder %s113, %s114
      %p123 = scmp.eq.s32.totalorder %s19, 0
      %p124 = por %p122, %p123
      %p125 = scmp.ne.s32.totalorder %s113, %s114
      %p126 = scmp.eq.s32.totalorder %s20, 2
      %p127 = por %p125, %p126
      %p129 = scmp.ne.s32.totalorder %s114, %s128
      %p130 = scmp.eq.s32.totalorder %s20, 0
      %p131 = por %p129, %p130
      %s132 = ssub.s32 %s14, %s21
      %p133 = scmp.eq.s32.totalorder %s132, 0
      %s135 = sadd.s32 %s134, 1
      %s136 = scalar_select %p133, %s134, %s135
      %p139 = pneg %p133
      %p140 = scmp.eq.s32.totalorder %s14, 2
      %p141 = por %p139, %p140
      %p142 = scmp.ne.s32.totalorder %s134, %s137
      %p143 = scmp.eq.s32.totalorder %s14, 0
      %p144 = por %p142, %p143
      %p145 = scmp.ne.s32.totalorder %s134, %s137
      %p146 = scmp.eq.s32.totalorder %s19, 2
      %p147 = por %p145, %p146
      %p148 = scmp.ne.s32.totalorder %s137, %s138
      %p149 = scmp.eq.s32.totalorder %s19, 0
      %p150 = por %p148, %p149
      %p151 = scmp.ne.s32.totalorder %s137, %s138
      %p152 = scmp.eq.s32.totalorder %s20, 2
      %p153 = por %p151, %p152
      %p155 = scmp.ne.s32.totalorder %s138, %s154
      %p156 = scmp.eq.s32.totalorder %s20, 0
      %p157 = por %p155, %p156
      %p158 = scmp.le.s32.totalorder 1, %s14
      %p159 = scmp.lt.s32.totalorder %s14, 4
      %p160 = pnand %p158, %p159
      %p161 = pneg %p160
      // Predicated region
      $region9: #{mlp_forward.1} parent=5 // pred_check
        _
      $region10: #{mlp_forward.1} parent=5 // pred_check_branch
        %163 = sbr.rel (%p160) target = $region12
      $region11: #{mlp_forward.1} parent=5 // pred_region
        %s164 = ssub.s32 %s14, 1
        // Predicated region
        $region13: #{mlp_forward.1} parent=11 // pred_check
          %p165 = pneg %p61
        $region14: #{mlp_forward.1} parent=11 // pred_check_branch
          %167 = sbr.rel (%p165) target = $region16
        $region15: #{mlp_forward.1} parent=11 // pred_region
          _
        $region16: #{mlp_forward.1} parent=11 // pred_fallthru
          _
        // Predicated region
        $region17: #{mlp_forward.1} parent=11 // pred_check
          %p168 = pneg %p82
        $region18: #{mlp_forward.1} parent=11 // pred_check_branch
          %170 = sbr.rel (%p168) target = $region20
        $region19: #{mlp_forward.1} parent=11 // pred_region
          %172 = vsyncadd [#allocation5], 0
          %s174 = sshll.u32 %s2, 4
          %s175 = int_to_ptr.vmem [resolvable:$true] %s174
          %177 = dma.vmem_to_smem %s175, 16, [#allocation4], [#allocation5]
        $region20: #{mlp_forward.1} parent=11 // pred_fallthru
          _
        // Predicated region
        $region21: #{mlp_forward.1} parent=11 // pred_check
          %p178 = pneg %p103
        $region22: #{mlp_forward.1} parent=11 // pred_check_branch
          %180 = sbr.rel (%p178) target = $region24
        $region23: #{mlp_forward.1} parent=11 // pred_region
          %182 = vsyncadd [#allocation7], 0
          %s184 = sshll.u32 %s3, 4
          %s185 = int_to_ptr.vmem [resolvable:$true] %s184
          %187 = dma.vmem_to_smem %s185, 16, [#allocation6], [#allocation7]
        $region24: #{mlp_forward.1} parent=11 // pred_fallthru
          _
        // Predicated region
        $region25: #{mlp_forward.1} parent=11 // pred_check
          %p188 = pneg %p124
        $region26: #{mlp_forward.1} parent=11 // pred_check_branch
          %190 = sbr.rel (%p188) target = $region28
        $region27: #{mlp_forward.1} parent=11 // pred_region
          _
        $region28: #{mlp_forward.1} parent=11 // pred_fallthru
          _
      $region12: #{mlp_forward.1} parent=5 // pred_fallthru
        _
      %p191 = scmp.lt.s32.totalorder %s14, 3
      // Predicated region
      $region29: #{mlp_forward.1} parent=5 // pred_check
        %p192 = pneg %p191
      $region30: #{mlp_forward.1} parent=5 // pred_check_branch
        %194 = sbr.rel (%p192) target = $region32
      $region31: #{mlp_forward.1} parent=5 // pred_region
        // Predicated region
        $region33: #{mlp_forward.1} parent=31 // pred_check
          %p195 = pneg %p34
        $region34: #{mlp_forward.1} parent=31 // pred_check_branch
          %197 = sbr.rel (%p195) target = $region36
        $region35: #{mlp_forward.1} parent=31 // pred_region
          %s198 = sand.u32 %s24, 1
          %s199 = sand.u32 %s24, 1
          %s200 = smul.addr %s199, 64
          %s201 = scalar_lea.vmem [#allocation3], %s200
          %s202 = smul.addr %s14, 8
          %s203 = scalar_lea.vmem %s0, %s202
          // Predicated region
          $region37: #{mlp_forward.1} parent=35 // pred_check
            _
          $region38: #{mlp_forward.1} parent=35 // pred_check_branch
            %205 = sbr.rel (0) target = $region40
          $region39: #{mlp_forward.1} parent=35 // pred_region
            // Predicated region
            $region41: #{mlp_forward.1} parent=39 // pred_check
              _
            $region42: #{mlp_forward.1} parent=39 // pred_check_branch
              %207 = sbr.rel (0) target = $region44
            $region43: #{mlp_forward.1} parent=39 // pred_region
              // Predicated region
              $region56: #{mlp_forward.1} parent=43 // pred_check
                _
              $region57: #{mlp_forward.1} parent=43 // pred_check_branch
                %237 = sbr.rel (0) target = $region59
              $region58: #{mlp_forward.1} parent=43 // pred_region
                loop: start=0, step=1, limit=1
                $region60: #{mlp_forward.1} parent=58 // loop_pre_header
                  _
                $region61: #{mlp_forward.1} parent=58 // loop_header
                  %s239 = sphi 0, %s243
                  %p240 = scmp.ge.s32.totalorder %s239, 1
                  %s244 = sphi %s203, %s203
                  %s245 = sphi %s201, %s201
                $region62: #{mlp_forward.1} parent=58 // loop_header_branch
                  %242 = sbr.rel (%p240) target = $region66
                $region63: #{mlp_forward.1} parent=58 // loop_body
                  %v246 = vld [vmem:[%s244] sm:$0xff]
                  %247 = vst [vmem:[%s245] sm:$0xff] %v246
                  %v248 = vld [vmem:[%s244 + $0x18] sm:$0xff]
                  %249 = vst [vmem:[%s245 + $0x8] sm:$0xff] %v248
                  %v250 = vld [vmem:[%s244 + $0x30] sm:$0xff]
                  %251 = vst [vmem:[%s245 + $0x10] sm:$0xff] %v250
                  %v252 = vld [vmem:[%s244 + $0x48] sm:$0xff]
                  %253 = vst [vmem:[%s245 + $0x18] sm:$0xff] %v252
                  %v254 = vld [vmem:[%s244 + $0x60] sm:$0xff]
                  %255 = vst [vmem:[%s245 + $0x20] sm:$0xff] %v254
                  %v256 = vld [vmem:[%s244 + $0x78] sm:$0xff]
                  %257 = vst [vmem:[%s245 + $0x28] sm:$0xff] %v256
                  %v258 = vld [vmem:[%s244 + $0x90] sm:$0xff]
                  %259 = vst [vmem:[%s245 + $0x30] sm:$0xff] %v258
                  %v260 = vld [vmem:[%s244 + $0xa8] sm:$0xff]
                  %261 = vst [vmem:[%s245 + $0x38] sm:$0xff] %v260
                $region64: #{mlp_forward.1} parent=58 // loop_footer
                  %s243 = sadd.s32 1, %s239
                $region65: #{mlp_forward.1} parent=58 // loop_footer_branch
                  %238 = sbr.rel target = $region61
                $region66: #{mlp_forward.1} parent=58 // loop_exit
                  _
              $region59: #{mlp_forward.1} parent=43 // pred_fallthru
                _
              // Predicated region
              $region67: #{mlp_forward.1} parent=43 // pred_check
                _
              $region68: #{mlp_forward.1} parent=43 // pred_check_branch
                %263 = sbr.rel target = $region70
              $region69: #{mlp_forward.1} parent=43 // pred_region
                _
              $region70: #{mlp_forward.1} parent=43 // pred_fallthru
                _
            $region44: #{mlp_forward.1} parent=39 // pred_fallthru
              _
            // Predicated region
            $region45: #{mlp_forward.1} parent=39 // pred_check
              _
            $region46: #{mlp_forward.1} parent=39 // pred_check_branch
              %209 = sbr.rel target = $region48
            $region47: #{mlp_forward.1} parent=39 // pred_region
              %s211 = ssub.s32 256, 1
              loop: start=0, step=1, limit=1
              $region49: #{mlp_forward.1} parent=47 // loop_pre_header
                _
              $region50: #{mlp_forward.1} parent=47 // loop_header
                %s213 = sphi 0, %s217
                %p214 = scmp.ge.s32.totalorder %s213, 1
                %s218 = sphi %s203, %s203
                %s219 = sphi %s201, %s201
              $region51: #{mlp_forward.1} parent=47 // loop_header_branch
                %216 = sbr.rel (%p214) target = $region55
              $region52: #{mlp_forward.1} parent=47 // loop_body
                %v220 = vld [vmem:[%s218] sm:%s211]
                %221 = vst [vmem:[%s219] sm:%s211] %v220
                %v222 = vld [vmem:[%s218 + $0x18] sm:%s211]
                %223 = vst [vmem:[%s219 + $0x8] sm:%s211] %v222
                %v224 = vld [vmem:[%s218 + $0x30] sm:%s211]
                %225 = vst [vmem:[%s219 + $0x10] sm:%s211] %v224
                %v226 = vld [vmem:[%s218 + $0x48] sm:%s211]
                %227 = vst [vmem:[%s219 + $0x18] sm:%s211] %v226
                %v228 = vld [vmem:[%s218 + $0x60] sm:%s211]
                %229 = vst [vmem:[%s219 + $0x20] sm:%s211] %v228
                %v230 = vld [vmem:[%s218 + $0x78] sm:%s211]
                %231 = vst [vmem:[%s219 + $0x28] sm:%s211] %v230
                %v232 = vld [vmem:[%s218 + $0x90] sm:%s211]
                %233 = vst [vmem:[%s219 + $0x30] sm:%s211] %v232
                %v234 = vld [vmem:[%s218 + $0xa8] sm:%s211]
                %235 = vst [vmem:[%s219 + $0x38] sm:%s211] %v234
              $region53: #{mlp_forward.1} parent=47 // loop_footer
                %s217 = sadd.s32 1, %s213
              $region54: #{mlp_forward.1} parent=47 // loop_footer_branch
                %212 = sbr.rel target = $region50
              $region55: #{mlp_forward.1} parent=47 // loop_exit
                _
            $region48: #{mlp_forward.1} parent=39 // pred_fallthru
              _
          $region40: #{mlp_forward.1} parent=35 // pred_fallthru
            _
          %264 = vnop
        $region36: #{mlp_forward.1} parent=31 // pred_fallthru
          _
      $region32: #{mlp_forward.1} parent=5 // pred_fallthru
        _
      %p265 = scmp.le.s32.totalorder 1, %s14
      %p266 = scmp.lt.s32.totalorder %s14, 4
      %p267 = pnand %p265, %p266
      %p268 = pneg %p267
      // Predicated region
      $region71: #{mlp_forward.1} parent=5 // pred_check
        _
      $region72: #{mlp_forward.1} parent=5 // pred_check_branch
        %270 = sbr.rel (%p267) target = $region74
      $region73: #{mlp_forward.1} parent=5 // pred_region
        %s271 = ssub.s32 %s14, 1
        %s272 = sand.u32 %s27, 1
        %s273 = sand.u32 %s27, 1
        %s274 = smul.addr %s273, 64
        %s275 = scalar_lea.vmem [#allocation3], %s274
        // Predicated region
        $region75: #{mlp_forward.1} parent=73 // pred_check
          %p276 = pneg %p40
        $region76: #{mlp_forward.1} parent=73 // pred_check_branch
          %278 = sbr.rel (%p276) target = $region78
        $region77: #{mlp_forward.1} parent=73 // pred_region
          _
        $region78: #{mlp_forward.1} parent=73 // pred_fallthru
          _
        // Predicated region
        $region79: #{mlp_forward.1} parent=73 // pred_check
          %p279 = pneg %p82
        $region80: #{mlp_forward.1} parent=73 // pred_check_branch
          %281 = sbr.rel (%p279) target = $region82
        $region81: #{mlp_forward.1} parent=73 // pred_region
          %283 = dma.done [#allocation5], 16
        $region82: #{mlp_forward.1} parent=73 // pred_fallthru
          _
        // Predicated region
        $region83: #{mlp_forward.1} parent=73 // pred_check
          %p284 = pneg %p103
        $region84: #{mlp_forward.1} parent=73 // pred_check_branch
          %286 = sbr.rel (%p284) target = $region86
        $region85: #{mlp_forward.1} parent=73 // pred_region
          %288 = dma.done [#allocation7], 16
        $region86: #{mlp_forward.1} parent=73 // pred_fallthru
          _
        %289 = sfence
        %s290 = sand.u32 %s27, 1
        %s291 = sand.u32 %s27, 1
        %s292 = smul.addr %s291, 64
        %s293 = scalar_lea.vmem [#allocation3], %s292
        %p294 = pneg %p40
        %p295 = pneg %p37
        %p296 = pneg %p61
        %p297 = pneg %p58
        %p298 = pneg %p82
        %p299 = pneg %p79
        %p300 = pneg %p103
        %p301 = pneg %p100
        %p302 = pneg %p124
        %p303 = pneg %p121
        %p304 = pneg %p150
        %p305 = pneg %p147
        %p306 = scmp.lt.s32.totalorder %s19, 2
        %s307 = scalar_select %p306, %s19, 2
        %s308 = smul.addr %s307, 8
        %s309 = scalar_lea.vmem %s5, %s308
        %p310 = scmp.lt.s32.totalorder %s19, 2
        %s311 = scalar_select %p310, %s19, 2
        %s312 = smul.addr %s311, 8
        %s313 = scalar_lea.vmem %s5, %s312
        %v314 = vld [vmem:[%s275] sm:$0xff]
        %v315 = vld [vmem:[%s275 + $0x8] sm:$0xff]
        %v316 = vld [vmem:[%s275 + $0x10] sm:$0xff]
        %v317 = vld [vmem:[%s275 + $0x18] sm:$0xff]
        %v318 = vld [vmem:[%s275 + $0x20] sm:$0xff]
        %v319 = vld [vmem:[%s275 + $0x28] sm:$0xff]
        %v320 = vld [vmem:[%s275 + $0x30] sm:$0xff]
        %v321 = vld [vmem:[%s275 + $0x38] sm:$0xff]
        %v322 = vld [vmem:[%s1] sm:$0xff]
        %v323 = vld [vmem:[%s1 + $0x8] sm:$0xff]
        %v324 = vld [vmem:[%s1 + $0x10] sm:$0xff]
        %v325 = vld [vmem:[%s1 + $0x18] sm:$0xff]
        %v326 = vld [vmem:[%s1 + $0x20] sm:$0xff]
        %v327 = vld [vmem:[%s1 + $0x28] sm:$0xff]
        %vm328 = vcmask 523264
        %v330 = vsel %vm328, %v322, 0
        %v333 = vsel %vm328, %v323, 0
        %v336 = vsel %vm328, %v324, 0
        %v339 = vsel %vm328, %v325, 0
        %v342 = vsel %vm328, %v326, 0
        %v345 = vsel %vm328, %v327, 0
        %347 = vmatpush.msra.mxu0 0.0
        %348 = vmatpush.msra.mxu0 0.0
        %349 = vmatpush.msra.mxu0 0.0
        %350 = vmatpush.msra.mxu0 0.0
        %351 = vmatpush.msra.mxu0 0.0
        %352 = vmatpush.msra.mxu0 0.0
        %353 = vmatpush.msra.mxu0 0.0
        %354 = vmatpush.msra.mxu0 0.0
        %355 = vmatpush.msra.mxu0 %v321
        %356 = vmatpush.msra.mxu0 %v320
        %357 = vmatpush.msra.mxu0 %v319
        %358 = vmatpush.msra.mxu0 %v318
        %359 = vmatpush.msra.mxu0 %v317
        %360 = vmatpush.msra.mxu0 %v316
        %361 = vmatpush.msra.mxu0 %v315
        %362 = vmatpush.msra.mxu0 %v314
        %363 = vmatmul.f32.gmra.mxu0 %v330
        %v364 = vpop.f32.mrf.mxu0
        %v365 = vadd.f32 0.0, %v364
        %366 = vmatmul.f32.gmra.mxu0 %v333
        %v367 = vpop.f32.mrf.mxu0
        %v368 = vadd.f32 0.0, %v367
        %369 = vmatmul.f32.gmra.mxu0 %v336
        %v370 = vpop.f32.mrf.mxu0
        %v371 = vadd.f32 0.0, %v370
        %372 = vmatmul.f32.gmra.mxu0 %v339
        %v373 = vpop.f32.mrf.mxu0
        %v374 = vadd.f32 0.0, %v373
        %375 = vmatmul.f32.gmra.mxu0 %v342
        %v376 = vpop.f32.mrf.mxu0
        %v377 = vadd.f32 0.0, %v376
        %378 = vmatmul.f32.gmra.mxu0 %v345
        %v379 = vpop.f32.mrf.mxu0
        %v380 = vadd.f32 0.0, %v379
        %381 = vdwg.mxu0
        %s382 = sld [smem:[#allocation4]]
        %v383 = vstv %s382
        %v384 = vadd.f32 %v365, %v383
        %v385 = vsub.f32 0.0, %v384
        %v386 = vmul.f32 %v385, 1.442695
        %v387 = vpow.pop %v386
        %v388 = vadd.f32 %v387, 1.0
        %v389 = vrcp.pop %v388
        %s390 = sld [smem:[#allocation6]]
        %v391 = vstv %s390
        %v392 = vmul.f32 %v389, %v391
        %s393 = sld [smem:[#allocation4 + $0x1]]
        %v394 = vstv %s393
        %v395 = vadd.f32 %v368, %v394
        %v396 = vsub.f32 0.0, %v395
        %v397 = vmul.f32 %v396, 1.442695
        %v398 = vpow.pop %v397
        %v399 = vadd.f32 %v398, 1.0
        %v400 = vrcp.pop %v399
        %s401 = sld [smem:[#allocation6 + $0x1]]
        %v402 = vstv %s401
        %v403 = vmul.f32 %v400, %v402
        %v404 = vadd.f32 %v392, %v403
        %s405 = sld [smem:[#allocation4 + $0x2]]
        %v406 = vstv %s405
        %v407 = vadd.f32 %v371, %v406
        %v408 = vsub.f32 0.0, %v407
        %v409 = vmul.f32 %v408, 1.442695
        %v410 = vpow.pop %v409
        %v411 = vadd.f32 %v410, 1.0
        %v412 = vrcp.pop %v411
        %s413 = sld [smem:[#allocation6 + $0x2]]
        %v414 = vstv %s413
        %v415 = vmul.f32 %v412, %v414
        %v416 = vadd.f32 %v404, %v415
        %s417 = sld [smem:[#allocation4 + $0x3]]
        %v418 = vstv %s417
        %v419 = vadd.f32 %v374, %v418
        %v420 = vsub.f32 0.0, %v419
        %v421 = vmul.f32 %v420, 1.442695
        %v422 = vpow.pop %v421
        %v423 = vadd.f32 %v422, 1.0
        %v424 = vrcp.pop %v423
        %s425 = sld [smem:[#allocation6 + $0x3]]
        %v426 = vstv %s425
        %v427 = vmul.f32 %v424, %v426
        %v428 = vadd.f32 %v416, %v427
        %s429 = sld [smem:[#allocation4 + $0x4]]
        %v430 = vstv %s429
        %v431 = vadd.f32 %v377, %v430
        %v432 = vsub.f32 0.0, %v431
        %v433 = vmul.f32 %v432, 1.442695
        %v434 = vpow.pop %v433
        %v435 = vadd.f32 %v434, 1.0
        %v436 = vrcp.pop %v435
        %s437 = sld [smem:[#allocation6 + $0x4]]
        %v438 = vstv %s437
        %v439 = vmul.f32 %v436, %v438
        %v440 = vadd.f32 %v428, %v439
        %s441 = sld [smem:[#allocation4 + $0x5]]
        %v442 = vstv %s441
        %v443 = vadd.f32 %v380, %v442
        %v444 = vsub.f32 0.0, %v443
        %v445 = vmul.f32 %v444, 1.442695
        %v446 = vpow.pop %v445
        %v447 = vadd.f32 %v446, 1.0
        %v448 = vrcp.pop %v447
        %s449 = sld [smem:[#allocation6 + $0x5]]
        %v450 = vstv %s449
        %v451 = vmul.f32 %v448, %v450
        %v452 = vadd.f32 %v440, %v451
        %s453 = sld [smem:[#allocation2]]
        %v454 = vstv %s453
        %v455 = vadd.f32 %v452, %v454
        %v456 = vsub.f32 0.0, %v455
        %v457 = vmul.f32 %v456, 1.442695
        %v458 = vpow.pop %v457
        %v459 = vadd.f32 %v458, 1.0
        %v460 = vrcp.pop %v459
        %461 = vst [vmem:[%s313] sm:$0xff] %v460
        %p462 = scmp.lt.s32.totalorder %s19, 2
        %s463 = scalar_select %p462, %s19, 2
        %s464 = smul.addr %s463, 8
        %s465 = scalar_lea.vmem %s5, %s464
        // Predicated region
        $region87: #{mlp_forward.1} parent=73 // pred_check
          %p466 = pneg %p147
        $region88: #{mlp_forward.1} parent=73 // pred_check_branch
          %468 = sbr.rel (%p466) target = $region90
        $region89: #{mlp_forward.1} parent=73 // pred_region
          _
        $region90: #{mlp_forward.1} parent=73 // pred_fallthru
          _
      $region74: #{mlp_forward.1} parent=5 // pred_fallthru
        _
      %p469 = scmp.le.s32.totalorder 2, %s14
      // Predicated region
      $region91: #{mlp_forward.1} parent=5 // pred_check
        %p470 = pneg %p469
      $region92: #{mlp_forward.1} parent=5 // pred_check_branch
        %472 = sbr.rel (%p470) target = $region94
      $region93: #{mlp_forward.1} parent=5 // pred_region
        %s473 = ssub.s32 %s14, 2
        // Predicated region
        $region95: #{mlp_forward.1} parent=93 // pred_check
          %p474 = pneg %p153
        $region96: #{mlp_forward.1} parent=93 // pred_check_branch
          %476 = sbr.rel (%p474) target = $region98
        $region97: #{mlp_forward.1} parent=93 // pred_region
          %p477 = scmp.lt.s32.totalorder %s20, 2
          %s478 = scalar_select %p477, %s20, 2
          %s479 = smul.addr %s478, 8
          %s480 = scalar_lea.vmem %s5, %s479
        $region98: #{mlp_forward.1} parent=93 // pred_fallthru
          _
      $region94: #{mlp_forward.1} parent=5 // pred_fallthru
        _
    $region6: #{mlp_forward.1} parent=1 // loop_footer
      %s18 = sadd.s32 1, %s14
    $region7: #{mlp_forward.1} parent=1 // loop_footer_branch
      %13 = sbr.rel target = $region3
    $region8: #{mlp_forward.1} parent=1 // loop_exit
      _
    %481 = vsyncpa [#allocation5], 1
    %s482 = scalar_lea.sflag [#allocation5], 1
    %483 = vsyncpa %s482, 1
    %484 = vsyncpa [#allocation7], 1

</llo_original>
